<compile_context>
chip_gen: v7x
topology: tpu7x:2x2x1
jax: 0.10.0
libtpu: 0.0.40
codegen_flags: <defaults>
</compile_context>

<pallas_src>
import functools

import jax
import jax.numpy as jnp
from jax.experimental import pallas as pl
from jax.experimental.pallas import tpu as pltpu


def _conformer_conv_kernel(*refs, channels, kernel_size, bblk, seq_len, padded_len,
                           fused_w1, has_mask, compute_dtype, matmul_dtype):
    C, K, Bb, T, L = channels, kernel_size, bblk, seq_len, padded_len
    P = (K - 1) // 2                       # symmetric (non-causal) padding
    NL = Bb * L
    cdt, mmdt = compute_dtype, matmul_dtype

    i = 0
    lens_ref = None
    if has_mask:
        lens_ref = refs[i]; i += 1         # (B,) int32 in SMEM (scalar prefetch)
    x_ref = refs[i]; i += 1
    if fused_w1:
        w1_ref, b1_ref = refs[i:i + 2]; i += 2
    else:
        w1a_ref, b1a_ref, w1b_ref, b1b_ref = refs[i:i + 4]; i += 4
    dw_ref, db_ref, w2_ref, b2_ref = refs[i:i + 4]; i += 4
    o_ref, gbuf_ref = refs[i:i + 2]

    x = x_ref[...]                                            # (Bb, T, C)

    mask = None
    if has_mask:
        # Prefix mask rebuilt in-kernel from per-batch lengths (SMEM scalars):
        # no (B, T) mask stream from HBM, no wrapper-side transpose.
        blk = pl.program_id(0)
        t_iota = jax.lax.broadcasted_iota(jnp.int32, (1, T, 1), 1)
        parts = [(t_iota < lens_ref[blk * Bb + bi]).astype(jnp.float32)
                 for bi in range(Bb)]
        mask = parts[0] if Bb == 1 else jnp.concatenate(parts, axis=0)   # (Bb, T, 1)
        x = x * mask.astype(x.dtype)

    # --- pointwise_conv1 + GLU (single pass of x through the MXU) -------------------
    xf = x.reshape(Bb * T, C).astype(mmdt)       # pack the batch block into MXU M rows
    if fused_w1:
        # C % 128 == 0: one fused (C, 2C) matmul; GLU halves are aligned lane slices.
        h = jnp.dot(xf, w1_ref[...], preferred_element_type=jnp.float32) + b1_ref[...]
        a, gate = h[:, :C], h[:, C:]
    else:
        # C % 128 != 0: slicing h at lane offset C would be a cross-lane shuffle,
        # so run two dots sharing the same xf read instead.
        a = jnp.dot(xf, w1a_ref[...], preferred_element_type=jnp.float32) + b1a_ref[...]
        gate = jnp.dot(xf, w1b_ref[...], preferred_element_type=jnp.float32) + b1b_ref[...]
    g = (a * jax.nn.sigmoid(gate)).astype(cdt)                # (Bb*T, C)

    # --- depthwise conv along time (BN folded into weights) + swish -----------------
    # Stage g once into the zero-tailed scratch; one roll per tap over the flattened
    # (Bb*L, C) view covers every batch slab at once.  L >= T + P guarantees any row
    # shifted past a sequence start/end lands in a zero tail, so no per-tap masks.
    gbuf_ref[:, T:, :] = jnp.zeros((Bb, L - T, C), cdt)       # tail stays zero
    gbuf_ref[:, :T, :] = g.reshape(Bb, T, C)
    gv = gbuf_ref[...].reshape(NL, C)

    dw = dw_ref[...]                                          # (K, C) = dw * bn_scale
    acc = jnp.broadcast_to(db_ref[...], (NL, C))              # f32; dw bias + bn_shift
    for k in range(K):
        sh = (P - k) % NL
        rolled = gv if sh == 0 else pltpu.roll(gv, shift=sh, axis=0)     # XLU rotate
        acc = acc + (rolled * dw[k, :]).astype(jnp.float32)
    y = acc.reshape(Bb, L, C)[:, :T, :]                       # drop the padding rows
    y = y * jax.nn.sigmoid(y)                                 # swish / SiLU (f32)

    # --- pointwise_conv2 -------------------------------------------------------------
    yf = y.reshape(Bb * T, C).astype(mmdt)
    out = jnp.dot(yf, w2_ref[...], preferred_element_type=jnp.float32) + b2_ref[...]
    out = out.reshape(Bb, T, C)
    if has_mask:
        out = out * mask                                      # fused post-mask
    o_ref[...] = out.astype(o_ref.dtype)


def _pick_bblk(B, T, C, L, K, block_budget_bytes, hard_limit_bytes):
    """Pick how many batches to pack per grid step, within a VMEM budget."""
    def live_bytes(bb):
        # rough f32 high-water mark per grid step:
        #   double-buffered x / out blocks + h(2C) + g + y intermediates ~ 7*bb*T*C
        #   gbuf scratch + f32 accumulator + rolled temporary            ~ 3*bb*L*C
        #   weights (double-buffered; see Buffered(1) TODO at top of file)
        wbytes = 2 * 4 * (3 * C * C + (K + 6) * C)
        return 4 * C * (7 * bb * T + 3 * bb * L) + wbytes

    if live_bytes(1) > hard_limit_bytes:
        # TODO(synk): tile the time axis with a (K-1)-row halo instead of failing.
        raise NotImplementedError(
            f"ConformerConv block T={T}, C={C} needs ~{live_bytes(1) >> 20} MiB of "
            f"VMEM (budget {hard_limit_bytes >> 20} MiB); time-axis tiling is not "
            f"implemented.")

    # Keep the grid length >= 2 whenever possible: feeds both v7x TensorCores
    # ('parallel' batch axis) and lets I/O DMAs pipeline against compute.
    cap = 1 if B == 1 else B // 2
    best = 1
    for cand in range(1, cap + 1):
        if B % cand:
            continue
        if cand > 1 and T % 8:
            continue                       # per-batch slabs must stay sublane-aligned
        if cand * T > 4096:
            continue                       # more M rows only adds VMEM, no MXU benefit
        if live_bytes(cand) <= block_budget_bytes:
            best = cand
    return best


def conformer_conv(x, params, mask_pad=None, lengths=None,
                   compute_dtype=jnp.float32, matmul_dtype=None):
    """ConformerConv forward.  x: (B, T, C).  Returns (out, new_cache).

    Padding can be given as `lengths` (B,) ints or as the module's `mask_pad`
    (B, 1, T) prefix mask.  compute_dtype: elementwise / depthwise-roll dtype
    (f32 default; bf16 recommended on v6e/v7x).  matmul_dtype: MXU operand dtype
    (defaults to compute_dtype; set bf16 on v5e to keep elementwise f32).
    """
    B, T, C = x.shape
    K = params["dw_w"].shape[0]
    P = (K - 1) // 2
    L = ((T + P + 7) // 8) * 8              # zero-extended slab length, >= T + P
    cdt = compute_dtype
    mmdt = compute_dtype if matmul_dtype is None else matmul_dtype

    # Host-side exact folds: BN (eval running stats) folded into the depthwise conv.
    dwf = (params["dw_w"] * params["bn_scale"]).astype(cdt)                    # (K, C)
    dbf = (params["dw_b"] * params["bn_scale"] + params["bn_shift"]).astype(jnp.float32)
    w2 = params["w2"].astype(mmdt)
    b2 = params["b2"].astype(jnp.float32)
    fused_w1 = (C % 128 == 0)               # GLU lane slices are only free then
    if fused_w1:
        w1 = jnp.concatenate([params["w1a"], params["w1b"]], axis=1).astype(mmdt)
        b1 = jnp.concatenate([params["b1a"], params["b1b"]], axis=1).astype(jnp.float32)
        weights = [w1, b1, dwf, dbf, w2, b2]
    else:
        weights = [params["w1a"].astype(mmdt), params["b1a"].astype(jnp.float32),
                   params["w1b"].astype(mmdt), params["b1b"].astype(jnp.float32),
                   dwf, dbf, w2, b2]

    if lengths is None and mask_pad is not None:
        # mask_pad is the module's (B, 1, T) right-padding mask -> prefix lengths.
        lengths = jnp.sum(mask_pad[:, 0, :].astype(jnp.int32), axis=-1)
    has_mask = lengths is not None
    if has_mask:
        lengths = jnp.asarray(lengths, jnp.int32)

    # Generation-aware VMEM budgeting (v7x: 64 MiB/TensorCore vs 128 on v5e/v6e).
    try:
        vmem_cap = int(pltpu.get_tpu_info().vmem_capacity_bytes)
    except Exception:
        vmem_cap = 64 << 20                 # conservative fallback (v7x per-core)
    vmem_limit = int(min(vmem_cap * 3 // 4, 96 << 20))
    Bblk = _pick_bblk(B, T, C, L, K,
                      block_budget_bytes=vmem_limit // 2,
                      hard_limit_bytes=vmem_limit)
    grid = (B // Bblk,)

    kernel = functools.partial(
        _conformer_conv_kernel, channels=C, kernel_size=K, bblk=Bblk, seq_len=T,
        padded_len=L, fused_w1=fused_w1, has_mask=has_mask,
        compute_dtype=cdt, matmul_dtype=mmdt)

    def wspec(arr):
        zeros = (0,) * arr.ndim             # grid-invariant operand
        return pl.BlockSpec(arr.shape, lambda i, *_: zeros)

    in_specs = [pl.BlockSpec((Bblk, T, C), lambda i, *_: (i, 0, 0))]
    in_specs += [wspec(w) for w in weights]

    grid_spec = pltpu.PrefetchScalarGridSpec(
        num_scalar_prefetch=1 if has_mask else 0,
        grid=grid,
        in_specs=in_specs,
        out_specs=pl.BlockSpec((Bblk, T, C), lambda i, *_: (i, 0, 0)),
        scratch_shapes=[pltpu.VMEM((Bblk, L, C), cdt)],
    )

    args = ([lengths] if has_mask else []) + [x] + weights
    out = pl.pallas_call(
        kernel,
        out_shape=jax.ShapeDtypeStruct((B, T, C), x.dtype),
        grid_spec=grid_spec,
        compiler_params=pltpu.CompilerParams(
            dimension_semantics=("parallel",),
            vmem_limit_bytes=vmem_limit),
    )(*args)

    # non-causal: new_cache is the dummy [0.0] tensor, mirroring the torch module.
    new_cache = jnp.array([0.0], dtype=x.dtype)
    return out, new_cache


def make_params(key, channels, kernel_size):
    """Deterministic synthetic parameters (shapes match the torch module's __init__)."""
    C, K = channels, kernel_size
    ks = jax.random.split(key, 12)
    s = 0.1
    # pointwise_conv1: Conv1d(C -> 2C, k=1); torch weight (2C, C, 1) stored transposed
    # and split into GLU "a" (first C out-channels) and gate "b" (last C) halves.
    w1a = s * jax.random.normal(ks[0], (C, C), jnp.float32)
    w1b = s * jax.random.normal(ks[1], (C, C), jnp.float32)
    b1a = s * jax.random.normal(ks[2], (1, C), jnp.float32)
    b1b = s * jax.random.normal(ks[3], (1, C), jnp.float32)
    # depthwise conv: torch weight (C, 1, K) -> stored as (K, C)
    dw_w = s * jax.random.normal(ks[4], (K, C), jnp.float32)
    dw_b = s * jax.random.normal(ks[5], (1, C), jnp.float32)
    # BatchNorm1d(C) eval-mode running stats + affine, pre-folded into scale/shift
    gamma = 1.0 + s * jax.random.normal(ks[6], (C,), jnp.float32)
    beta = s * jax.random.normal(ks[7], (C,), jnp.float32)
    running_mean = s * jax.random.normal(ks[8], (C,), jnp.float32)
    running_var = 1.0 + 0.05 * jax.random.uniform(ks[9], (C,), jnp.float32)
    eps = 1e-5
    bn_scale = (gamma / jnp.sqrt(running_var + eps)).reshape(1, C)
    bn_shift = (beta - running_mean * bn_scale[0]).reshape(1, C)
    # pointwise_conv2: Conv1d(C -> C, k=1); torch weight (C, C, 1) stored transposed
    w2 = s * jax.random.normal(ks[10], (C, C), jnp.float32)
    b2 = s * jax.random.normal(ks[11], (1, C), jnp.float32)
    return dict(w1a=w1a, b1a=b1a, w1b=w1b, b1b=b1b,
                dw_w=dw_w, dw_b=dw_b,
                bn_scale=bn_scale, bn_shift=bn_shift,
                w2=w2, b2=b2)


def reference(x, p, mask_pad=None):
    """Pure-JAX reference of the same forward (eval-mode BN), for correctness checks."""
    B, T, C = x.shape
    K = p["dw_w"].shape[0]
    P = (K - 1) // 2
    if mask_pad is not None:
        x = x * jnp.transpose(mask_pad, (0, 2, 1)).astype(x.dtype)
    a = jnp.einsum("btc,cd->btd", x, p["w1a"]) + p["b1a"]
    b = jnp.einsum("btc,cd->btd", x, p["w1b"]) + p["b1b"]
    g = a * jax.nn.sigmoid(b)
    gp = jnp.pad(g, ((0, 0), (P, P), (0, 0)))
    acc = jnp.zeros((B, T, C), jnp.float32)
    for k in range(K):
        acc = acc + gp[:, k:k + T, :] * p["dw_w"][k]
    acc = acc + p["dw_b"]
    y = acc * p["bn_scale"] + p["bn_shift"]
    y = y * jax.nn.sigmoid(y)
    out = jnp.einsum("btc,cd->btd", y, p["w2"]) + p["b2"]
    if mask_pad is not None:
        out = out * jnp.transpose(mask_pad, (0, 2, 1)).astype(out.dtype)
    return out


if __name__ == "__main__":
    K = 15

    def run_case(seed, B, T, C, lengths=None, via_mask_pad=False, tol=1e-4, **kw):
        kx, kp = jax.random.split(jax.random.fold_in(jax.random.PRNGKey(0), seed))
        x = jax.random.normal(kx, (B, T, C), jnp.float32)
        params = make_params(kp, C, K)
        lens = None
        mask_pad = None
        if lengths is not None:
            lens = jnp.asarray(lengths, jnp.int32)
            mask_pad = (jnp.arange(T)[None, :] < lens[:, None]
                        ).astype(jnp.float32)[:, None, :]               # (B, 1, T)
        if via_mask_pad:
            out, cache = conformer_conv(x, params, mask_pad=mask_pad, **kw)
        else:
            out, cache = conformer_conv(x, params, lengths=lens, **kw)
        out = jax.block_until_ready(out)
        jax.block_until_ready(cache)
        ref = reference(x, params, mask_pad=mask_pad)
        assert out.shape == (B, T, C) and out.dtype == x.dtype
        err = float(jnp.max(jnp.abs(out - ref)))
        assert err <= tol, (
            f"B={B} T={T} C={C} lengths={lengths} kw={kw}: max abs err {err}")

    # f32, two-dot GLU path (C % 128 != 0): unmasked / length-masked / mask_pad API.
    run_case(0, B=2, T=16, C=32)
    run_case(0, B=2, T=16, C=32, lengths=[16, 11])
    run_case(0, B=2, T=16, C=32, lengths=[16, 11], via_mask_pad=True)
    # f32 with batch packing (Bblk=2): flattened multi-slab roll + in-kernel masks.
    run_case(1, B=4, T=16, C=32, lengths=[16, 11, 16, 7])
    # f32, fused (C, 2C) single-dot GLU path with aligned lane slices (C % 128 == 0).
    run_case(2, B=2, T=16, C=128, lengths=[16, 9])
    # bf16 MXU operands, f32 elementwise / rolls (v5e-style mixed precision).
    run_case(2, B=2, T=16, C=128, matmul_dtype=jnp.bfloat16, tol=3e-2)
    # TODO(synk): compute_dtype=jnp.bfloat16 (bf16 depthwise rolls) is wired for
    #             v6e/v7x but not asserted here against the f32 reference.

    print("KERNEL_OK")
</pallas_src>

<mosaic_0001>
module attributes {stable_mosaic.version = 11 : i64} {
  func.func @_conformer_conv_kernel(%arg0: i32, %arg1: memref<1x16x32xf32, #tpu.memory_space<vmem>>, %arg2: memref<32x32xf32, #tpu.memory_space<vmem>>, %arg3: memref<1x32xf32, #tpu.memory_space<vmem>>, %arg4: memref<32x32xf32, #tpu.memory_space<vmem>>, %arg5: memref<1x32xf32, #tpu.memory_space<vmem>>, %arg6: memref<15x32xf32, #tpu.memory_space<vmem>>, %arg7: memref<1x32xf32, #tpu.memory_space<vmem>>, %arg8: memref<32x32xf32, #tpu.memory_space<vmem>>, %arg9: memref<1x32xf32, #tpu.memory_space<vmem>>, %arg10: memref<1x16x32xf32, #tpu.memory_space<vmem>>, %arg11: memref<1x24x32xf32, #tpu.memory_space<vmem>>) attributes {dimension_semantics = [#tpu.dimension_semantics<parallel>], iteration_bounds = array<i64: 2>, scalar_prefetch = 0 : i64, scratch_operands = 1 : i64, tpu.core_type = #tpu.core_type<tc>, window_params = [{transform_indices = @transform_0, window_bounds = array<i64: 1, 16, 32>}, {pipeline_mode = #tpu.pipeline_mode<synchronous>, transform_indices = @transform_1, window_bounds = array<i64: 32, 32>}, {pipeline_mode = #tpu.pipeline_mode<synchronous>, transform_indices = @transform_2, window_bounds = array<i64: 1, 32>}, {pipeline_mode = #tpu.pipeline_mode<synchronous>, transform_indices = @transform_3, window_bounds = array<i64: 32, 32>}, {pipeline_mode = #tpu.pipeline_mode<synchronous>, transform_indices = @transform_4, window_bounds = array<i64: 1, 32>}, {pipeline_mode = #tpu.pipeline_mode<synchronous>, transform_indices = @transform_5, window_bounds = array<i64: 15, 32>}, {pipeline_mode = #tpu.pipeline_mode<synchronous>, transform_indices = @transform_6, window_bounds = array<i64: 1, 32>}, {pipeline_mode = #tpu.pipeline_mode<synchronous>, transform_indices = @transform_7, window_bounds = array<i64: 32, 32>}, {pipeline_mode = #tpu.pipeline_mode<synchronous>, transform_indices = @transform_8, window_bounds = array<i64: 1, 32>}, {transform_indices = @transform_9, window_bounds = array<i64: 1, 16, 32>}]} {
    %c0 = arith.constant 0 : index
    %c0_0 = arith.constant 0 : index
    %c0_1 = arith.constant 0 : index
    %0 = vector.load %arg1[%c0, %c0_0, %c0_1] : memref<1x16x32xf32, #tpu.memory_space<vmem>>, vector<1x16x32xf32>
    %1 = vector.shape_cast %0 : vector<1x16x32xf32> to vector<16x32xf32>
    %c0_2 = arith.constant 0 : index
    %c0_3 = arith.constant 0 : index
    %2 = vector.load %arg2[%c0_2, %c0_3] : memref<32x32xf32, #tpu.memory_space<vmem>>, vector<32x32xf32>
    %cst = arith.constant dense<0.000000e+00> : vector<16x32xf32>
    %3 = tpu.matmul %1, %2, %cst {dimension_numbers = #tpu.dot_dimension_numbers<[1], [0], [0], [1], [0, 0, 1, 1], [], []>} : vector<16x32xf32>, vector<32x32xf32>, vector<16x32xf32> -> vector<16x32xf32>
    %c0_4 = arith.constant 0 : index
    %c0_5 = arith.constant 0 : index
    %4 = vector.load %arg3[%c0_4, %c0_5] : memref<1x32xf32, #tpu.memory_space<vmem>>, vector<1x32xf32>
    %5 = vector.broadcast %4 : vector<1x32xf32> to vector<16x32xf32>
    %6 = arith.addf %3, %5 : vector<16x32xf32>
    %c0_6 = arith.constant 0 : index
    %c0_7 = arith.constant 0 : index
    %7 = vector.load %arg4[%c0_6, %c0_7] : memref<32x32xf32, #tpu.memory_space<vmem>>, vector<32x32xf32>
    %cst_8 = arith.constant dense<0.000000e+00> : vector<16x32xf32>
    %8 = tpu.matmul %1, %7, %cst_8 {dimension_numbers = #tpu.dot_dimension_numbers<[1], [0], [0], [1], [0, 0, 1, 1], [], []>} : vector<16x32xf32>, vector<32x32xf32>, vector<16x32xf32> -> vector<16x32xf32>
    %c0_9 = arith.constant 0 : index
    %c0_10 = arith.constant 0 : index
    %9 = vector.load %arg5[%c0_9, %c0_10] : memref<1x32xf32, #tpu.memory_space<vmem>>, vector<1x32xf32>
    %10 = vector.broadcast %9 : vector<1x32xf32> to vector<16x32xf32>
    %11 = arith.addf %8, %10 : vector<16x32xf32>
    %12 = arith.negf %11 : vector<16x32xf32>
    %13 = math.exp %12 : vector<16x32xf32>
    %cst_11 = arith.constant 1.000000e+00 : f32
    %14 = vector.broadcast %cst_11 : f32 to vector<16x32xf32>
    %15 = arith.addf %14, %13 : vector<16x32xf32>
    %16 = arith.divf %14, %15 : vector<16x32xf32>
    %17 = arith.mulf %6, %16 : vector<16x32xf32>
    %cst_12 = arith.constant 0.000000e+00 : f32
    %18 = vector.broadcast %cst_12 : f32 to vector<1x8x32xf32>
    %c0_13 = arith.constant 0 : index
    %c16 = arith.constant 16 : index
    %c0_14 = arith.constant 0 : index
    %19 = vector.load %arg11[%c0_13, %c16, %c0_14] : memref<1x24x32xf32, #tpu.memory_space<vmem>>, vector<1x8x32xf32>
    tpu.vector_store %arg11[%c0_13, %c16, %c0_14], %18 {strides = array<i32>} : memref<1x24x32xf32, #tpu.memory_space<vmem>>, vector<1x8x32xf32>,
    %20 = vector.shape_cast %17 : vector<16x32xf32> to vector<1x16x32xf32>
    %c0_15 = arith.constant 0 : index
    %c0_16 = arith.constant 0 : index
    %c0_17 = arith.constant 0 : index
    %21 = vector.load %arg11[%c0_15, %c0_16, %c0_17] : memref<1x24x32xf32, #tpu.memory_space<vmem>>, vector<1x16x32xf32>
    tpu.vector_store %arg11[%c0_15, %c0_16, %c0_17], %20 {strides = array<i32>} : memref<1x24x32xf32, #tpu.memory_space<vmem>>, vector<1x16x32xf32>,
    %c0_18 = arith.constant 0 : index
    %c0_19 = arith.constant 0 : index
    %c0_20 = arith.constant 0 : index
    %22 = vector.load %arg11[%c0_18, %c0_19, %c0_20] : memref<1x24x32xf32, #tpu.memory_space<vmem>>, vector<1x24x32xf32>
    %23 = vector.shape_cast %22 : vector<1x24x32xf32> to vector<24x32xf32>
    %c0_21 = arith.constant 0 : index
    %c0_22 = arith.constant 0 : index
    %24 = vector.load %arg6[%c0_21, %c0_22] : memref<15x32xf32, #tpu.memory_space<vmem>>, vector<15x32xf32>
    %c0_23 = arith.constant 0 : index
    %c0_24 = arith.constant 0 : index
    %25 = vector.load %arg7[%c0_23, %c0_24] : memref<1x32xf32, #tpu.memory_space<vmem>>, vector<1x32xf32>
    %26 = vector.shape_cast %25 : vector<1x32xf32> to vector<1x32xf32>
    %27 = vector.broadcast %26 : vector<1x32xf32> to vector<24x32xf32>
    %c7_i32 = arith.constant 7 : i32
    %28 = tpu.dynamic_rotate %23 by %c7_i32 dim 0 : vector<24x32xf32>, i32 -> vector<24x32xf32>
    %29 = vector.extract_strided_slice %24 {offsets = [0, 0], sizes = [1, 32], strides = [1, 1]} : vector<15x32xf32> to vector<1x32xf32>
    %30 = vector.shape_cast %29 : vector<1x32xf32> to vector<32xf32>
    %31 = vector.shape_cast %30 : vector<32xf32> to vector<1x32xf32>
    %32 = vector.broadcast %31 : vector<1x32xf32> to vector<24x32xf32>
    %33 = arith.mulf %28, %32 : vector<24x32xf32>
    %34 = arith.addf %27, %33 : vector<24x32xf32>
    %c6_i32 = arith.constant 6 : i32
    %35 = tpu.dynamic_rotate %23 by %c6_i32 dim 0 : vector<24x32xf32>, i32 -> vector<24x32xf32>
    %36 = vector.extract_strided_slice %24 {offsets = [1, 0], sizes = [1, 32], strides = [1, 1]} : vector<15x32xf32> to vector<1x32xf32>
    %37 = vector.shape_cast %36 : vector<1x32xf32> to vector<32xf32>
    %38 = vector.shape_cast %37 : vector<32xf32> to vector<1x32xf32>
    %39 = vector.broadcast %38 : vector<1x32xf32> to vector<24x32xf32>
    %40 = arith.mulf %35, %39 : vector<24x32xf32>
    %41 = arith.addf %34, %40 : vector<24x32xf32>
    %c5_i32 = arith.constant 5 : i32
    %42 = tpu.dynamic_rotate %23 by %c5_i32 dim 0 : vector<24x32xf32>, i32 -> vector<24x32xf32>
    %43 = vector.extract_strided_slice %24 {offsets = [2, 0], sizes = [1, 32], strides = [1, 1]} : vector<15x32xf32> to vector<1x32xf32>
    %44 = vector.shape_cast %43 : vector<1x32xf32> to vector<32xf32>
    %45 = vector.shape_cast %44 : vector<32xf32> to vector<1x32xf32>
    %46 = vector.broadcast %45 : vector<1x32xf32> to vector<24x32xf32>
    %47 = arith.mulf %42, %46 : vector<24x32xf32>
    %48 = arith.addf %41, %47 : vector<24x32xf32>
    %c4_i32 = arith.constant 4 : i32
    %49 = tpu.dynamic_rotate %23 by %c4_i32 dim 0 : vector<24x32xf32>, i32 -> vector<24x32xf32>
    %50 = vector.extract_strided_slice %24 {offsets = [3, 0], sizes = [1, 32], strides = [1, 1]} : vector<15x32xf32> to vector<1x32xf32>
    %51 = vector.shape_cast %50 : vector<1x32xf32> to vector<32xf32>
    %52 = vector.shape_cast %51 : vector<32xf32> to vector<1x32xf32>
    %53 = vector.broadcast %52 : vector<1x32xf32> to vector<24x32xf32>
    %54 = arith.mulf %49, %53 : vector<24x32xf32>
    %55 = arith.addf %48, %54 : vector<24x32xf32>
    %c3_i32 = arith.constant 3 : i32
    %56 = tpu.dynamic_rotate %23 by %c3_i32 dim 0 : vector<24x32xf32>, i32 -> vector<24x32xf32>
    %57 = vector.extract_strided_slice %24 {offsets = [4, 0], sizes = [1, 32], strides = [1, 1]} : vector<15x32xf32> to vector<1x32xf32>
    %58 = vector.shape_cast %57 : vector<1x32xf32> to vector<32xf32>
    %59 = vector.shape_cast %58 : vector<32xf32> to vector<1x32xf32>
    %60 = vector.broadcast %59 : vector<1x32xf32> to vector<24x32xf32>
    %61 = arith.mulf %56, %60 : vector<24x32xf32>
    %62 = arith.addf %55, %61 : vector<24x32xf32>
    %c2_i32 = arith.constant 2 : i32
    %63 = tpu.dynamic_rotate %23 by %c2_i32 dim 0 : vector<24x32xf32>, i32 -> vector<24x32xf32>
    %64 = vector.extract_strided_slice %24 {offsets = [5, 0], sizes = [1, 32], strides = [1, 1]} : vector<15x32xf32> to vector<1x32xf32>
    %65 = vector.shape_cast %64 : vector<1x32xf32> to vector<32xf32>
    %66 = vector.shape_cast %65 : vector<32xf32> to vector<1x32xf32>
    %67 = vector.broadcast %66 : vector<1x32xf32> to vector<24x32xf32>
    %68 = arith.mulf %63, %67 : vector<24x32xf32>
    %69 = arith.addf %62, %68 : vector<24x32xf32>
    %c1_i32 = arith.constant 1 : i32
    %70 = tpu.dynamic_rotate %23 by %c1_i32 dim 0 : vector<24x32xf32>, i32 -> vector<24x32xf32>
    %71 = vector.extract_strided_slice %24 {offsets = [6, 0], sizes = [1, 32], strides = [1, 1]} : vector<15x32xf32> to vector<1x32xf32>
    %72 = vector.shape_cast %71 : vector<1x32xf32> to vector<32xf32>
    %73 = vector.shape_cast %72 : vector<32xf32> to vector<1x32xf32>
    %74 = vector.broadcast %73 : vector<1x32xf32> to vector<24x32xf32>
    %75 = arith.mulf %70, %74 : vector<24x32xf32>
    %76 = arith.addf %69, %75 : vector<24x32xf32>
    %77 = vector.extract_strided_slice %24 {offsets = [7, 0], sizes = [1, 32], strides = [1, 1]} : vector<15x32xf32> to vector<1x32xf32>
    %78 = vector.shape_cast %77 : vector<1x32xf32> to vector<32xf32>
    %79 = vector.shape_cast %78 : vector<32xf32> to vector<1x32xf32>
    %80 = vector.broadcast %79 : vector<1x32xf32> to vector<24x32xf32>
    %81 = arith.mulf %23, %80 : vector<24x32xf32>
    %82 = arith.addf %76, %81 : vector<24x32xf32>
    %c23_i32 = arith.constant 23 : i32
    %83 = tpu.dynamic_rotate %23 by %c23_i32 dim 0 : vector<24x32xf32>, i32 -> vector<24x32xf32>
    %84 = vector.extract_strided_slice %24 {offsets = [8, 0], sizes = [1, 32], strides = [1, 1]} : vector<15x32xf32> to vector<1x32xf32>
    %85 = vector.shape_cast %84 : vector<1x32xf32> to vector<32xf32>
    %86 = vector.shape_cast %85 : vector<32xf32> to vector<1x32xf32>
    %87 = vector.broadcast %86 : vector<1x32xf32> to vector<24x32xf32>
    %88 = arith.mulf %83, %87 : vector<24x32xf32>
    %89 = arith.addf %82, %88 : vector<24x32xf32>
    %c22_i32 = arith.constant 22 : i32
    %90 = tpu.dynamic_rotate %23 by %c22_i32 dim 0 : vector<24x32xf32>, i32 -> vector<24x32xf32>
    %91 = vector.extract_strided_slice %24 {offsets = [9, 0], sizes = [1, 32], strides = [1, 1]} : vector<15x32xf32> to vector<1x32xf32>
    %92 = vector.shape_cast %91 : vector<1x32xf32> to vector<32xf32>
    %93 = vector.shape_cast %92 : vector<32xf32> to vector<1x32xf32>
    %94 = vector.broadcast %93 : vector<1x32xf32> to vector<24x32xf32>
    %95 = arith.mulf %90, %94 : vector<24x32xf32>
    %96 = arith.addf %89, %95 : vector<24x32xf32>
    %c21_i32 = arith.constant 21 : i32
    %97 = tpu.dynamic_rotate %23 by %c21_i32 dim 0 : vector<24x32xf32>, i32 -> vector<24x32xf32>
    %98 = vector.extract_strided_slice %24 {offsets = [10, 0], sizes = [1, 32], strides = [1, 1]} : vector<15x32xf32> to vector<1x32xf32>
    %99 = vector.shape_cast %98 : vector<1x32xf32> to vector<32xf32>
    %100 = vector.shape_cast %99 : vector<32xf32> to vector<1x32xf32>
    %101 = vector.broadcast %100 : vector<1x32xf32> to vector<24x32xf32>
    %102 = arith.mulf %97, %101 : vector<24x32xf32>
    %103 = arith.addf %96, %102 : vector<24x32xf32>
    %c20_i32 = arith.constant 20 : i32
    %104 = tpu.dynamic_rotate %23 by %c20_i32 dim 0 : vector<24x32xf32>, i32 -> vector<24x32xf32>
    %105 = vector.extract_strided_slice %24 {offsets = [11, 0], sizes = [1, 32], strides = [1, 1]} : vector<15x32xf32> to vector<1x32xf32>
    %106 = vector.shape_cast %105 : vector<1x32xf32> to vector<32xf32>
    %107 = vector.shape_cast %106 : vector<32xf32> to vector<1x32xf32>
    %108 = vector.broadcast %107 : vector<1x32xf32> to vector<24x32xf32>
    %109 = arith.mulf %104, %108 : vector<24x32xf32>
    %110 = arith.addf %103, %109 : vector<24x32xf32>
    %c19_i32 = arith.constant 19 : i32
    %111 = tpu.dynamic_rotate %23 by %c19_i32 dim 0 : vector<24x32xf32>, i32 -> vector<24x32xf32>
    %112 = vector.extract_strided_slice %24 {offsets = [12, 0], sizes = [1, 32], strides = [1, 1]} : vector<15x32xf32> to vector<1x32xf32>
    %113 = vector.shape_cast %112 : vector<1x32xf32> to vector<32xf32>
    %114 = vector.shape_cast %113 : vector<32xf32> to vector<1x32xf32>
    %115 = vector.broadcast %114 : vector<1x32xf32> to vector<24x32xf32>
    %116 = arith.mulf %111, %115 : vector<24x32xf32>
    %117 = arith.addf %110, %116 : vector<24x32xf32>
    %c18_i32 = arith.constant 18 : i32
    %118 = tpu.dynamic_rotate %23 by %c18_i32 dim 0 : vector<24x32xf32>, i32 -> vector<24x32xf32>
    %119 = vector.extract_strided_slice %24 {offsets = [13, 0], sizes = [1, 32], strides = [1, 1]} : vector<15x32xf32> to vector<1x32xf32>
    %120 = vector.shape_cast %119 : vector<1x32xf32> to vector<32xf32>
    %121 = vector.shape_cast %120 : vector<32xf32> to vector<1x32xf32>
    %122 = vector.broadcast %121 : vector<1x32xf32> to vector<24x32xf32>
    %123 = arith.mulf %118, %122 : vector<24x32xf32>
    %124 = arith.addf %117, %123 : vector<24x32xf32>
    %c17_i32 = arith.constant 17 : i32
    %125 = tpu.dynamic_rotate %23 by %c17_i32 dim 0 : vector<24x32xf32>, i32 -> vector<24x32xf32>
    %126 = vector.extract_strided_slice %24 {offsets = [14, 0], sizes = [1, 32], strides = [1, 1]} : vector<15x32xf32> to vector<1x32xf32>
    %127 = vector.shape_cast %126 : vector<1x32xf32> to vector<32xf32>
    %128 = vector.shape_cast %127 : vector<32xf32> to vector<1x32xf32>
    %129 = vector.broadcast %128 : vector<1x32xf32> to vector<24x32xf32>
    %130 = arith.mulf %125, %129 : vector<24x32xf32>
    %131 = arith.addf %124, %130 : vector<24x32xf32>
    %132 = vector.shape_cast %131 : vector<24x32xf32> to vector<1x24x32xf32>
    %133 = vector.extract_strided_slice %132 {offsets = [0, 0, 0], sizes = [1, 16, 32], strides = [1, 1, 1]} : vector<1x24x32xf32> to vector<1x16x32xf32>
    %134 = arith.negf %133 : vector<1x16x32xf32>
    %135 = math.exp %134 : vector<1x16x32xf32>
    %cst_25 = arith.constant 1.000000e+00 : f32
    %136 = vector.broadcast %cst_25 : f32 to vector<1x16x32xf32>
    %137 = arith.addf %136, %135 : vector<1x16x32xf32>
    %138 = arith.divf %136, %137 : vector<1x16x32xf32>
    %139 = arith.mulf %133, %138 : vector<1x16x32xf32>
    %140 = vector.shape_cast %139 : vector<1x16x32xf32> to vector<16x32xf32>
    %c0_26 = arith.constant 0 : index
    %c0_27 = arith.constant 0 : index
    %141 = vector.load %arg8[%c0_26, %c0_27] : memref<32x32xf32, #tpu.memory_space<vmem>>, vector<32x32xf32>
    %cst_28 = arith.constant dense<0.000000e+00> : vector<16x32xf32>
    %142 = tpu.matmul %140, %141, %cst_28 {dimension_numbers = #tpu.dot_dimension_numbers<[1], [0], [0], [1], [0, 0, 1, 1], [], []>} : vector<16x32xf32>, vector<32x32xf32>, vector<16x32xf32> -> vector<16x32xf32>
    %c0_29 = arith.constant 0 : index
    %c0_30 = arith.constant 0 : index
    %143 = vector.load %arg9[%c0_29, %c0_30] : memref<1x32xf32, #tpu.memory_space<vmem>>, vector<1x32xf32>
    %144 = vector.broadcast %143 : vector<1x32xf32> to vector<16x32xf32>
    %145 = arith.addf %142, %144 : vector<16x32xf32>
    %146 = vector.shape_cast %145 : vector<16x32xf32> to vector<1x16x32xf32>
    %c0_31 = arith.constant 0 : index
    %c0_32 = arith.constant 0 : index
    %c0_33 = arith.constant 0 : index
    %147 = vector.load %arg10[%c0_31, %c0_32, %c0_33] : memref<1x16x32xf32, #tpu.memory_space<vmem>>, vector<1x16x32xf32>
    tpu.vector_store %arg10[%c0_31, %c0_32, %c0_33], %146 {strides = array<i32>} : memref<1x16x32xf32, #tpu.memory_space<vmem>>, vector<1x16x32xf32>,
    return
  }
  func.func @transform_0(%arg0: i32) -> (i32, i32, i32) {
    %c0_i32 = arith.constant 0 : i32
    %c0_i32_0 = arith.constant 0 : i32
    %c0_i32_1 = arith.constant 0 : i32
    return %arg0, %c0_i32, %c0_i32_0 : i32, i32, i32
  }
  func.func @transform_1(%arg0: i32) -> (i32, i32) {
    %c0_i32 = arith.constant 0 : i32
    %c0_i32_0 = arith.constant 0 : i32
    %c0_i32_1 = arith.constant 0 : i32
    return %c0_i32, %c0_i32_0 : i32, i32
  }
  func.func @transform_2(%arg0: i32) -> (i32, i32) {
    %c0_i32 = arith.constant 0 : i32
    %c0_i32_0 = arith.constant 0 : i32
    %c0_i32_1 = arith.constant 0 : i32
    return %c0_i32, %c0_i32_0 : i32, i32
  }
  func.func @transform_3(%arg0: i32) -> (i32, i32) {
    %c0_i32 = arith.constant 0 : i32
    %c0_i32_0 = arith.constant 0 : i32
    %c0_i32_1 = arith.constant 0 : i32
    return %c0_i32, %c0_i32_0 : i32, i32
  }
  func.func @transform_4(%arg0: i32) -> (i32, i32) {
    %c0_i32 = arith.constant 0 : i32
    %c0_i32_0 = arith.constant 0 : i32
    %c0_i32_1 = arith.constant 0 : i32
    return %c0_i32, %c0_i32_0 : i32, i32
  }
  func.func @transform_5(%arg0: i32) -> (i32, i32) {
    %c0_i32 = arith.constant 0 : i32
    %c0_i32_0 = arith.constant 0 : i32
    %c0_i32_1 = arith.constant 0 : i32
    return %c0_i32, %c0_i32_0 : i32, i32
  }
  func.func @transform_6(%arg0: i32) -> (i32, i32) {
    %c0_i32 = arith.constant 0 : i32
    %c0_i32_0 = arith.constant 0 : i32
    %c0_i32_1 = arith.constant 0 : i32
    return %c0_i32, %c0_i32_0 : i32, i32
  }
  func.func @transform_7(%arg0: i32) -> (i32, i32) {
    %c0_i32 = arith.constant 0 : i32
    %c0_i32_0 = arith.constant 0 : i32
    %c0_i32_1 = arith.constant 0 : i32
    return %c0_i32, %c0_i32_0 : i32, i32
  }
  func.func @transform_8(%arg0: i32) -> (i32, i32) {
    %c0_i32 = arith.constant 0 : i32
    %c0_i32_0 = arith.constant 0 : i32
    %c0_i32_1 = arith.constant 0 : i32
    return %c0_i32, %c0_i32_0 : i32, i32
  }
  func.func @transform_9(%arg0: i32) -> (i32, i32, i32) {
    %c0_i32 = arith.constant 0 : i32
    %c0_i32_0 = arith.constant 0 : i32
    %c0_i32_1 = arith.constant 0 : i32
    return %arg0, %c0_i32, %c0_i32_0 : i32, i32, i32
  }
}

</mosaic_0001>

<llo_original>
// kernel: tpu_custom_call.1
$region0: #{tpu_custom_call.1}
  #allocation0 [shape = 'u32[]', space=smem, size = 0x4, offset = 0x4, fixed_abs, tag = 'smem constant byte address 0x4 - core index']
  #allocation1 [shape = 'u32[144,128]{1,0:T(1,128)}', space=vmem, size = 0x12000, scoped, tag = 'internal scratch']
  #allocation2 [shape = 'f32[1,24,32]{2,1,0:T(8,128)}', space=vmem, size = 0x3000, scoped, tag = 'scratch operand']
  %s0 = inlined_call_operand.hbm [shape: f32[2,16,32], index: 0, kind: input, shape index: {}]
  %s1 = inlined_call_operand.hbm [shape: f32[32,32], index: 1, kind: input, shape index: {}]
  %s2 = inlined_call_operand.vmem [shape: f32[1,32], index: 2, kind: input, shape index: {}]
  %s3 = inlined_call_operand.hbm [shape: f32[32,32], index: 3, kind: input, shape index: {}]
  %s4 = inlined_call_operand.vmem [shape: f32[1,32], index: 4, kind: input, shape index: {}]
  %s5 = inlined_call_operand.vmem [shape: f32[15,32], index: 5, kind: input, shape index: {}]
  %s6 = inlined_call_operand.vmem [shape: f32[1,32], index: 6, kind: input, shape index: {}]
  %s7 = inlined_call_operand.hbm [shape: f32[32,32], index: 7, kind: input, shape index: {}]
  %s8 = inlined_call_operand.vmem [shape: f32[1,32], index: 8, kind: input, shape index: {}]
  %s9 = inlined_call_operand.hbm [shape: f32[2,16,32], index: 9, kind: output, shape index: {}]
  %s10 = sld [smem:[#allocation0]]
  $region85: #{tpu_custom_call.1} parent=0
    _
  %s12 = ssub.s32 1, %s10
  %s13 = scalar_select 0, %s12, %s10
  $region1: #{tpu_custom_call.1} parent=0
    #allocation3 [shape = 'u8[16384]{0}', space=vmem, size = 0x4000, scoped, tag = 'input window, operand 0']
    #allocation4 [shape = 's32[2]{0}', space=sflag, size = 0x8, scoped, tag = 'scoped memory for tpu_custom_call.1']
    #allocation5 [shape = 's32[2]{0}', space=sflag, size = 0x8, scoped, tag = 'scoped memory for tpu_custom_call.1']
    #allocation6 [shape = 'u8[16384]{0}', space=vmem, size = 0x4000, scoped, tag = 'input window, operand 1, single buffered']
    #allocation7 [shape = 's32[1]{0}', space=sflag, size = 0x4, scoped, tag = 'scoped memory for tpu_custom_call.1']
    #allocation8 [shape = 'u8[16384]{0}', space=vmem, size = 0x4000, scoped, tag = 'input window, operand 3, single buffered']
    #allocation9 [shape = 'u8[16384]{0}', space=vmem, size = 0x4000, scoped, tag = 'input window, operand 7, single buffered']
    #allocation10 [shape = 's32[1]{0}', space=sflag, size = 0x4, scoped, tag = 'scoped memory for tpu_custom_call.1']
    #allocation11 [shape = 'u8[16384]{0}', space=vmem, size = 0x4000, scoped, tag = 'output window, operand 0']
    %14 = vsyncpa [#allocation4], 0
    %s15 = scalar_lea.sflag [#allocation4], 1
    %16 = vsyncpa %s15, 0
    %17 = vsyncpa [#allocation7], 0
    %18 = vsyncpa [#allocation10], 0
    %19 = vsyncpa [#allocation5], 0
    %s20 = scalar_lea.sflag [#allocation5], 1
    %21 = vsyncpa %s20, 0
    loop: start=0, step=1, limit=4
    $region2: #{tpu_custom_call.1} parent=1 // loop_pre_header
      _
    $region3: #{tpu_custom_call.1} parent=1 // loop_header
      %s23 = sphi 0, %s27
      %p24 = scmp.ge.s32.totalorder %s23, 4
      %s33 = sphi 0, %s35
      %s36 = sphi 0, %s33
      %s37 = sphi 0, %s36
      %s53 = sphi 0, %s37
      %s57 = sphi 0, %s57
      %s59 = sphi 0, %s57
      %s60 = sphi 0, %s59
      %s74 = sphi 0, %s60
      %s78 = sphi 0, %s78
      %s80 = sphi 0, %s78
      %s81 = sphi 0, %s80
      %s95 = sphi 0, %s81
      %s99 = sphi 0, %s99
      %s101 = sphi 0, %s99
      %s102 = sphi 0, %s101
      %s116 = sphi 0, %s102
      %s120 = sphi 0, %s120
      %s122 = sphi 0, %s120
      %s123 = sphi 0, %s122
      %s137 = sphi 0, %s123
      %s141 = sphi 0, %s141
      %s143 = sphi 0, %s141
      %s144 = sphi 0, %s143
      %s158 = sphi 0, %s144
      %s162 = sphi 0, %s162
      %s164 = sphi 0, %s162
      %s165 = sphi 0, %s164
      %s179 = sphi 0, %s165
      %s183 = sphi 0, %s183
      %s185 = sphi 0, %s183
      %s186 = sphi 0, %s185
      %s200 = sphi 0, %s186
      %s204 = sphi 0, %s204
      %s206 = sphi 0, %s204
      %s207 = sphi 0, %s206
      %s221 = sphi 0, %s207
      %s227 = sphi 0, %s229
      %s230 = sphi 0, %s227
      %s231 = sphi 0, %s230
      %s247 = sphi 0, %s231
    $region4: #{tpu_custom_call.1} parent=1 // loop_header_branch
      %26 = sbr.rel (%p24) target = $region8
    $region5: #{tpu_custom_call.1} parent=1 // loop_body
      %s28 = ssub.s32 %s23, 1
      %s29 = ssub.s32 %s23, 2
      %s30 = sadd.s32 %s23, 1
      %s31 = ssub.s32 %s23, %s30
      %p32 = scmp.eq.s32.totalorder %s31, 0
      %s34 = sadd.s32 %s33, 1
      %s35 = scalar_select %p32, %s33, %s34
      %p38 = pneg %p32
      %p39 = scmp.eq.s32.totalorder %s23, 1
      %p40 = por %p38, %p39
      %p41 = scmp.ne.s32.totalorder %s33, %s36
      %p42 = scmp.eq.s32.totalorder %s23, 0
      %p43 = por %p41, %p42
      %p44 = scmp.ne.s32.totalorder %s33, %s36
      %p45 = scmp.eq.s32.totalorder %s28, 1
      %p46 = por %p44, %p45
      %p47 = scmp.ne.s32.totalorder %s36, %s37
      %p48 = scmp.eq.s32.totalorder %s28, 0
      %p49 = por %p47, %p48
      %p50 = scmp.ne.s32.totalorder %s36, %s37
      %p51 = scmp.eq.s32.totalorder %s29, 1
      %p52 = por %p50, %p51
      %p54 = scmp.ne.s32.totalorder %s37, %s53
      %p55 = scmp.eq.s32.totalorder %s29, 0
      %p56 = por %p54, %p55
      %s58 = sadd.s32 %s57, 1
      %p61 = scmp.eq.s32.totalorder %s23, 1
      %p62 = scmp.ne.s32.totalorder %s57, %s59
      %p63 = scmp.eq.s32.totalorder %s23, 0
      %p64 = por %p62, %p63
      %p65 = scmp.ne.s32.totalorder %s57, %s59
      %p66 = scmp.eq.s32.totalorder %s28, 1
      %p67 = por %p65, %p66
      %p68 = scmp.ne.s32.totalorder %s59, %s60
      %p69 = scmp.eq.s32.totalorder %s28, 0
      %p70 = por %p68, %p69
      %p71 = scmp.ne.s32.totalorder %s59, %s60
      %p72 = scmp.eq.s32.totalorder %s29, 1
      %p73 = por %p71, %p72
      %p75 = scmp.ne.s32.totalorder %s60, %s74
      %p76 = scmp.eq.s32.totalorder %s29, 0
      %p77 = por %p75, %p76
      %s79 = sadd.s32 %s78, 1
      %p82 = scmp.eq.s32.totalorder %s23, 1
      %p83 = scmp.ne.s32.totalorder %s78, %s80
      %p84 = scmp.eq.s32.totalorder %s23, 0
      %p85 = por %p83, %p84
      %p86 = scmp.ne.s32.totalorder %s78, %s80
      %p87 = scmp.eq.s32.totalorder %s28, 1
      %p88 = por %p86, %p87
      %p89 = scmp.ne.s32.totalorder %s80, %s81
      %p90 = scmp.eq.s32.totalorder %s28, 0
      %p91 = por %p89, %p90
      %p92 = scmp.ne.s32.totalorder %s80, %s81
      %p93 = scmp.eq.s32.totalorder %s29, 1
      %p94 = por %p92, %p93
      %p96 = scmp.ne.s32.totalorder %s81, %s95
      %p97 = scmp.eq.s32.totalorder %s29, 0
      %p98 = por %p96, %p97
      %s100 = sadd.s32 %s99, 1
      %p103 = scmp.eq.s32.totalorder %s23, 1
      %p104 = scmp.ne.s32.totalorder %s99, %s101
      %p105 = scmp.eq.s32.totalorder %s23, 0
      %p106 = por %p104, %p105
      %p107 = scmp.ne.s32.totalorder %s99, %s101
      %p108 = scmp.eq.s32.totalorder %s28, 1
      %p109 = por %p107, %p108
      %p110 = scmp.ne.s32.totalorder %s101, %s102
      %p111 = scmp.eq.s32.totalorder %s28, 0
      %p112 = por %p110, %p111
      %p113 = scmp.ne.s32.totalorder %s101, %s102
      %p114 = scmp.eq.s32.totalorder %s29, 1
      %p115 = por %p113, %p114
      %p117 = scmp.ne.s32.totalorder %s102, %s116
      %p118 = scmp.eq.s32.totalorder %s29, 0
      %p119 = por %p117, %p118
      %s121 = sadd.s32 %s120, 1
      %p124 = scmp.eq.s32.totalorder %s23, 1
      %p125 = scmp.ne.s32.totalorder %s120, %s122
      %p126 = scmp.eq.s32.totalorder %s23, 0
      %p127 = por %p125, %p126
      %p128 = scmp.ne.s32.totalorder %s120, %s122
      %p129 = scmp.eq.s32.totalorder %s28, 1
      %p130 = por %p128, %p129
      %p131 = scmp.ne.s32.totalorder %s122, %s123
      %p132 = scmp.eq.s32.totalorder %s28, 0
      %p133 = por %p131, %p132
      %p134 = scmp.ne.s32.totalorder %s122, %s123
      %p135 = scmp.eq.s32.totalorder %s29, 1
      %p136 = por %p134, %p135
      %p138 = scmp.ne.s32.totalorder %s123, %s137
      %p139 = scmp.eq.s32.totalorder %s29, 0
      %p140 = por %p138, %p139
      %s142 = sadd.s32 %s141, 1
      %p145 = scmp.eq.s32.totalorder %s23, 1
      %p146 = scmp.ne.s32.totalorder %s141, %s143
      %p147 = scmp.eq.s32.totalorder %s23, 0
      %p148 = por %p146, %p147
      %p149 = scmp.ne.s32.totalorder %s141, %s143
      %p150 = scmp.eq.s32.totalorder %s28, 1
      %p151 = por %p149, %p150
      %p152 = scmp.ne.s32.totalorder %s143, %s144
      %p153 = scmp.eq.s32.totalorder %s28, 0
      %p154 = por %p152, %p153
      %p155 = scmp.ne.s32.totalorder %s143, %s144
      %p156 = scmp.eq.s32.totalorder %s29, 1
      %p157 = por %p155, %p156
      %p159 = scmp.ne.s32.totalorder %s144, %s158
      %p160 = scmp.eq.s32.totalorder %s29, 0
      %p161 = por %p159, %p160
      %s163 = sadd.s32 %s162, 1
      %p166 = scmp.eq.s32.totalorder %s23, 1
      %p167 = scmp.ne.s32.totalorder %s162, %s164
      %p168 = scmp.eq.s32.totalorder %s23, 0
      %p169 = por %p167, %p168
      %p170 = scmp.ne.s32.totalorder %s162, %s164
      %p171 = scmp.eq.s32.totalorder %s28, 1
      %p172 = por %p170, %p171
      %p173 = scmp.ne.s32.totalorder %s164, %s165
      %p174 = scmp.eq.s32.totalorder %s28, 0
      %p175 = por %p173, %p174
      %p176 = scmp.ne.s32.totalorder %s164, %s165
      %p177 = scmp.eq.s32.totalorder %s29, 1
      %p178 = por %p176, %p177
      %p180 = scmp.ne.s32.totalorder %s165, %s179
      %p181 = scmp.eq.s32.totalorder %s29, 0
      %p182 = por %p180, %p181
      %s184 = sadd.s32 %s183, 1
      %p187 = scmp.eq.s32.totalorder %s23, 1
      %p188 = scmp.ne.s32.totalorder %s183, %s185
      %p189 = scmp.eq.s32.totalorder %s23, 0
      %p190 = por %p188, %p189
      %p191 = scmp.ne.s32.totalorder %s183, %s185
      %p192 = scmp.eq.s32.totalorder %s28, 1
      %p193 = por %p191, %p192
      %p194 = scmp.ne.s32.totalorder %s185, %s186
      %p195 = scmp.eq.s32.totalorder %s28, 0
      %p196 = por %p194, %p195
      %p197 = scmp.ne.s32.totalorder %s185, %s186
      %p198 = scmp.eq.s32.totalorder %s29, 1
      %p199 = por %p197, %p198
      %p201 = scmp.ne.s32.totalorder %s186, %s200
      %p202 = scmp.eq.s32.totalorder %s29, 0
      %p203 = por %p201, %p202
      %s205 = sadd.s32 %s204, 1
      %p208 = scmp.eq.s32.totalorder %s23, 1
      %p209 = scmp.ne.s32.totalorder %s204, %s206
      %p210 = scmp.eq.s32.totalorder %s23, 0
      %p211 = por %p209, %p210
      %p212 = scmp.ne.s32.totalorder %s204, %s206
      %p213 = scmp.eq.s32.totalorder %s28, 1
      %p214 = por %p212, %p213
      %p215 = scmp.ne.s32.totalorder %s206, %s207
      %p216 = scmp.eq.s32.totalorder %s28, 0
      %p217 = por %p215, %p216
      %p218 = scmp.ne.s32.totalorder %s206, %s207
      %p219 = scmp.eq.s32.totalorder %s29, 1
      %p220 = por %p218, %p219
      %p222 = scmp.ne.s32.totalorder %s207, %s221
      %p223 = scmp.eq.s32.totalorder %s29, 0
      %p224 = por %p222, %p223
      %s225 = ssub.s32 %s23, %s30
      %p226 = scmp.eq.s32.totalorder %s225, 0
      %s228 = sadd.s32 %s227, 1
      %s229 = scalar_select %p226, %s227, %s228
      %p232 = pneg %p226
      %p233 = scmp.eq.s32.totalorder %s23, 1
      %p234 = por %p232, %p233
      %p235 = scmp.ne.s32.totalorder %s227, %s230
      %p236 = scmp.eq.s32.totalorder %s23, 0
      %p237 = por %p235, %p236
      %p238 = scmp.ne.s32.totalorder %s227, %s230
      %p239 = scmp.eq.s32.totalorder %s28, 1
      %p240 = por %p238, %p239
      %p241 = scmp.ne.s32.totalorder %s230, %s231
      %p242 = scmp.eq.s32.totalorder %s28, 0
      %p243 = por %p241, %p242
      %p244 = scmp.ne.s32.totalorder %s230, %s231
      %p245 = scmp.eq.s32.totalorder %s29, 1
      %p246 = por %p244, %p245
      %p248 = scmp.ne.s32.totalorder %s231, %s247
      %p249 = scmp.eq.s32.totalorder %s29, 0
      %p250 = por %p248, %p249
      %p251 = scmp.le.s32.totalorder 1, %s23
      %p252 = scmp.lt.s32.totalorder %s23, 3
      %p253 = pnand %p251, %p252
      %p254 = pneg %p253
      // Predicated region
      $region9: #{tpu_custom_call.1} parent=5 // pred_check
        _
      $region10: #{tpu_custom_call.1} parent=5 // pred_check_branch
        %256 = sbr.rel (%p253) target = $region12
      $region11: #{tpu_custom_call.1} parent=5 // pred_region
        %s257 = ssub.s32 %s23, 1
        // Predicated region
        $region13: #{tpu_custom_call.1} parent=11 // pred_check
          %p258 = pneg %p70
        $region14: #{tpu_custom_call.1} parent=11 // pred_check_branch
          %260 = sbr.rel (%p258) target = $region16
        $region15: #{tpu_custom_call.1} parent=11 // pred_region
          %s262 = ssub.s32 512, 512
          %263 = vsyncadd [#allocation7], %s262
          %s264 = sshll.u32 [#allocation6], 4
          %s265 = int_to_ptr.vmem [resolvable:$true] %s264
          %270 = dma.hbm_to_vmem [thread:$0]  %s1, 512, %s265, [#allocation7], 128, 128, 8
        $region16: #{tpu_custom_call.1} parent=11 // pred_fallthru
          _
        // Predicated region
        $region17: #{tpu_custom_call.1} parent=11 // pred_check
          %p271 = pneg %p91
        $region18: #{tpu_custom_call.1} parent=11 // pred_check_branch
          %273 = sbr.rel (%p271) target = $region20
        $region19: #{tpu_custom_call.1} parent=11 // pred_region
          _
        $region20: #{tpu_custom_call.1} parent=11 // pred_fallthru
          _
        // Predicated region
        $region21: #{tpu_custom_call.1} parent=11 // pred_check
          %p274 = pneg %p112
        $region22: #{tpu_custom_call.1} parent=11 // pred_check_branch
          %276 = sbr.rel (%p274) target = $region24
        $region23: #{tpu_custom_call.1} parent=11 // pred_region
          %s278 = ssub.s32 512, 512
          %279 = vsyncadd [#allocation7], %s278
          %s280 = sshll.u32 [#allocation8], 4
          %s281 = int_to_ptr.vmem [resolvable:$true] %s280
          %286 = dma.hbm_to_vmem [thread:$0]  %s3, 512, %s281, [#allocation7], 128, 128, 8
        $region24: #{tpu_custom_call.1} parent=11 // pred_fallthru
          _
        // Predicated region
        $region25: #{tpu_custom_call.1} parent=11 // pred_check
          %p287 = pneg %p133
        $region26: #{tpu_custom_call.1} parent=11 // pred_check_branch
          %289 = sbr.rel (%p287) target = $region28
        $region27: #{tpu_custom_call.1} parent=11 // pred_region
          _
        $region28: #{tpu_custom_call.1} parent=11 // pred_fallthru
          _
        // Predicated region
        $region29: #{tpu_custom_call.1} parent=11 // pred_check
          %p290 = pneg %p154
        $region30: #{tpu_custom_call.1} parent=11 // pred_check_branch
          %292 = sbr.rel (%p290) target = $region32
        $region31: #{tpu_custom_call.1} parent=11 // pred_region
          _
        $region32: #{tpu_custom_call.1} parent=11 // pred_fallthru
          _
        // Predicated region
        $region33: #{tpu_custom_call.1} parent=11 // pred_check
          %p293 = pneg %p175
        $region34: #{tpu_custom_call.1} parent=11 // pred_check_branch
          %295 = sbr.rel (%p293) target = $region36
        $region35: #{tpu_custom_call.1} parent=11 // pred_region
          _
        $region36: #{tpu_custom_call.1} parent=11 // pred_fallthru
          _
        // Predicated region
        $region37: #{tpu_custom_call.1} parent=11 // pred_check
          %p296 = pneg %p196
        $region38: #{tpu_custom_call.1} parent=11 // pred_check_branch
          %298 = sbr.rel (%p296) target = $region40
        $region39: #{tpu_custom_call.1} parent=11 // pred_region
          %s300 = ssub.s32 512, 512
          %301 = vsyncadd [#allocation10], %s300
          %s302 = sshll.u32 [#allocation9], 4
          %s303 = int_to_ptr.vmem [resolvable:$true] %s302
          %308 = dma.hbm_to_vmem [thread:$0]  %s7, 512, %s303, [#allocation10], 128, 128, 8
        $region40: #{tpu_custom_call.1} parent=11 // pred_fallthru
          _
        // Predicated region
        $region41: #{tpu_custom_call.1} parent=11 // pred_check
          %p309 = pneg %p217
        $region42: #{tpu_custom_call.1} parent=11 // pred_check_branch
          %311 = sbr.rel (%p309) target = $region44
        $region43: #{tpu_custom_call.1} parent=11 // pred_region
          _
        $region44: #{tpu_custom_call.1} parent=11 // pred_fallthru
          _
      $region12: #{tpu_custom_call.1} parent=5 // pred_fallthru
        _
      %p312 = scmp.lt.s32.totalorder %s23, 2
      // Predicated region
      $region45: #{tpu_custom_call.1} parent=5 // pred_check
        %p313 = pneg %p312
      $region46: #{tpu_custom_call.1} parent=5 // pred_check_branch
        %315 = sbr.rel (%p313) target = $region48
      $region47: #{tpu_custom_call.1} parent=5 // pred_region
        // Predicated region
        $region49: #{tpu_custom_call.1} parent=47 // pred_check
          %p316 = pneg %p43
        $region50: #{tpu_custom_call.1} parent=47 // pred_check_branch
          %318 = sbr.rel (%p316) target = $region52
        $region51: #{tpu_custom_call.1} parent=47 // pred_region
          %s319 = sand.u32 %s33, 1
          %s320 = scalar_lea.sflag [#allocation4], %s319
          %s321 = sand.u32 %s33, 1
          %s322 = smul.addr %s321, 16
          %s323 = scalar_lea.vmem [#allocation3], %s322
          %s325 = ssub.s32 256, 256
          %326 = vsyncadd %s320, %s325
          %s327 = smul.addr %s23, 2
          %s328 = smul.addr %s327, 128
          %s329 = scalar_lea.hbm %s0, %s328
          %s330 = sshll.u32 %s323, 4
          %s331 = int_to_ptr.vmem [resolvable:$true] %s330
          %336 = dma.hbm_to_vmem [thread:$0]  %s329, 256, %s331, %s320, 128, 128, 8
        $region52: #{tpu_custom_call.1} parent=47 // pred_fallthru
          _
      $region48: #{tpu_custom_call.1} parent=5 // pred_fallthru
        _
      %p337 = scmp.le.s32.totalorder 1, %s23
      %p338 = scmp.lt.s32.totalorder %s23, 3
      %p339 = pnand %p337, %p338
      %p340 = pneg %p339
      // Predicated region
      $region53: #{tpu_custom_call.1} parent=5 // pred_check
        _
      $region54: #{tpu_custom_call.1} parent=5 // pred_check_branch
        %342 = sbr.rel (%p339) target = $region56
      $region55: #{tpu_custom_call.1} parent=5 // pred_region
        %s343 = ssub.s32 %s23, 1
        %s344 = sand.u32 %s36, 1
        %s345 = scalar_lea.sflag [#allocation4], %s344
        %s346 = sand.u32 %s36, 1
        %s347 = smul.addr %s346, 16
        %s348 = scalar_lea.vmem [#allocation3], %s347
        // Predicated region
        $region57: #{tpu_custom_call.1} parent=55 // pred_check
          %p349 = pneg %p49
        $region58: #{tpu_custom_call.1} parent=55 // pred_check_branch
          %351 = sbr.rel (%p349) target = $region60
        $region59: #{tpu_custom_call.1} parent=55 // pred_region
          %352 = dma.done %s345, 256
        $region60: #{tpu_custom_call.1} parent=55 // pred_fallthru
          _
        // Predicated region
        $region61: #{tpu_custom_call.1} parent=55 // pred_check
          %p353 = pneg %p70
        $region62: #{tpu_custom_call.1} parent=55 // pred_check_branch
          %355 = sbr.rel (%p353) target = $region64
        $region63: #{tpu_custom_call.1} parent=55 // pred_region
          %356 = dma.done [#allocation7], 512
        $region64: #{tpu_custom_call.1} parent=55 // pred_fallthru
          _
        // Predicated region
        $region65: #{tpu_custom_call.1} parent=55 // pred_check
          %p357 = pneg %p112
        $region66: #{tpu_custom_call.1} parent=55 // pred_check_branch
          %359 = sbr.rel (%p357) target = $region68
        $region67: #{tpu_custom_call.1} parent=55 // pred_region
          %360 = dma.done [#allocation7], 512
        $region68: #{tpu_custom_call.1} parent=55 // pred_fallthru
          _
        // Predicated region
        $region69: #{tpu_custom_call.1} parent=55 // pred_check
          %p361 = pneg %p196
        $region70: #{tpu_custom_call.1} parent=55 // pred_check_branch
          %363 = sbr.rel (%p361) target = $region72
        $region71: #{tpu_custom_call.1} parent=55 // pred_region
          %364 = dma.done [#allocation10], 512
        $region72: #{tpu_custom_call.1} parent=55 // pred_fallthru
          _
        %s365 = sand.u32 %s36, 1
        %s366 = scalar_lea.sflag [#allocation4], %s365
        %s367 = sand.u32 %s36, 1
        %s368 = smul.addr %s367, 16
        %s369 = scalar_lea.vmem [#allocation3], %s368
        %p370 = pneg %p49
        %p371 = pneg %p46
        %p372 = pneg %p70
        %p373 = pneg %p67
        %p374 = pneg %p91
        %p375 = pneg %p88
        %p376 = pneg %p112
        %p377 = pneg %p109
        %p378 = pneg %p133
        %p379 = pneg %p130
        %p380 = pneg %p154
        %p381 = pneg %p151
        %p382 = pneg %p175
        %p383 = pneg %p172
        %p384 = pneg %p196
        %p385 = pneg %p193
        %p386 = pneg %p217
        %p387 = pneg %p214
        %p388 = pneg %p243
        %p389 = pneg %p240
        %s390 = sand.u32 %s230, 1
        %s391 = scalar_lea.sflag [#allocation5], %s390
        %s392 = sand.u32 %s230, 1
        %s393 = smul.addr %s392, 16
        %s394 = scalar_lea.vmem [#allocation11], %s393
        %v395 = vld [vmem:[%s348] sm:$0xff]
        %v396 = vld [vmem:[%s348 + $0x8] sm:$0xff]
        %v397 = vld [vmem:[#allocation6] sm:$0xff]
        %v398 = vld [vmem:[#allocation6 + $0x8] sm:$0xff]
        %v399 = vld [vmem:[#allocation6 + $0x10] sm:$0xff]
        %v400 = vld [vmem:[#allocation6 + $0x18] sm:$0xff]
        %v401 = vld [vmem:[%s2] sm:$0x1]
        %v403 = vlaneseq
        %v404 = vshrl.u32 %v403, 7
        %v405 = vsub.s32 0, %v404
        %v406 = vrot.slane %v401, %v405
        %vm408 = vcmask 261120
        %v410 = vsel %vm408, %v395, 0
        %v413 = vsel %vm408, %v396, 0
        %415 = vmatprep.subr.mxu0 0.0
        %416 = vmatpush1.msra.mxu0 %v397
        %417 = vmatprep.subr.mxu0 0.0
        %418 = vmatpush1.msra.mxu0 %v398
        %419 = vmatprep.subr.mxu0 0.0
        %420 = vmatpush1.msra.mxu0 %v399
        %421 = vmatprep.subr.mxu0 0.0
        %422 = vmatpush1.msra.mxu0 %v400
        %423 = vmatprep.subr.mxu0 0.0
        %424 = vmatpush1.msra.mxu0 0.0
        %425 = vmatprep.subr.mxu0 0.0
        %426 = vmatpush1.msra.mxu0 0.0
        %427 = vmatprep.subr.mxu0 0.0
        %428 = vmatpush1.msra.mxu0 0.0
        %429 = vmatprep.subr.mxu0 0.0
        %430 = vmatpush1.msra.mxu0 0.0
        %431 = vmatprep.subr.mxu0 0.0
        %432 = vmatpush1.msra.mxu0 0.0
        %433 = vmatprep.subr.mxu0 0.0
        %434 = vmatpush1.msra.mxu0 0.0
        %435 = vmatprep.subr.mxu0 0.0
        %436 = vmatpush1.msra.mxu0 0.0
        %437 = vmatprep.subr.mxu0 0.0
        %438 = vmatpush1.msra.mxu0 0.0
        %439 = vmatprep.subr.mxu0 0.0
        %440 = vmatpush1.msra.mxu0 0.0
        %441 = vmatprep.subr.mxu0 0.0
        %442 = vmatpush1.msra.mxu0 0.0
        %443 = vmatprep.subr.mxu0 0.0
        %444 = vmatpush1.msra.mxu0 0.0
        %445 = vmatprep.subr.mxu0 0.0
        %446 = vmatpush1.msra.mxu0 0.0
        %447 = vmatprep.subr.mxu0 0.0
        %448 = vmatpush1.msra.mxu0 0.0
        %449 = vmatprep.subr.mxu0 0.0
        %450 = vmatpush1.msra.mxu0 0.0
        %451 = vmatprep.subr.mxu0 0.0
        %452 = vmatpush1.msra.mxu0 0.0
        %453 = vmatprep.subr.mxu0 0.0
        %454 = vmatpush1.msra.mxu0 0.0
        %455 = vmatprep.subr.mxu0 0.0
        %456 = vmatpush1.msra.mxu0 0.0
        %457 = vmatprep.subr.mxu0 0.0
        %458 = vmatpush1.msra.mxu0 0.0
        %459 = vmatprep.subr.mxu0 0.0
        %460 = vmatpush1.msra.mxu0 0.0
        %461 = vmatprep.subr.mxu0 0.0
        %462 = vmatpush1.msra.mxu0 0.0
        %463 = vmatprep.subr.mxu0 0.0
        %464 = vmatpush1.msra.mxu0 0.0
        %465 = vmatprep.subr.mxu0 0.0
        %466 = vmatpush1.msra.mxu0 0.0
        %467 = vmatprep.subr.mxu0 0.0
        %468 = vmatpush1.msra.mxu0 0.0
        %469 = vmatprep.subr.mxu0 0.0
        %470 = vmatpush1.msra.mxu0 0.0
        %471 = vmatprep.subr.mxu0 0.0
        %472 = vmatpush1.msra.mxu0 0.0
        %473 = vmatprep.subr.mxu0 0.0
        %474 = vmatpush1.msra.mxu0 0.0
        %475 = vmatprep.subr.mxu0 0.0
        %476 = vmatpush1.msra.mxu0 0.0
        %477 = vmatprep.subr.mxu0 0.0
        %478 = vmatpush1.msra.mxu0 0.0
        %479 = vmatprep.mubr.f32.mxu0 0.0
        %480 = vmatmul.mubr.f32.gmra.mrb[0].mxu0 %v410
        %v481 = vpop.f32.mrb[0].mxu0
        %v482 = vadd.f32 %v406, %v481
        %v483 = vpop.f32.mrb[0].mxu0
        %484 = vmatprep.mubr.f32.mxu0 0.0
        %485 = vmatmul.mubr.f32.gmra.mrb[0].mxu0 %v413
        %v486 = vpop.f32.mrb[0].mxu0
        %v487 = vadd.f32 %v406, %v486
        %v488 = vpop.f32.mrb[0].mxu0
        %489 = vdwg.mxu0
        %v490 = vld [vmem:[#allocation8] sm:$0xff]
        %v491 = vld [vmem:[#allocation8 + $0x8] sm:$0xff]
        %v492 = vld [vmem:[#allocation8 + $0x10] sm:$0xff]
        %v493 = vld [vmem:[#allocation8 + $0x18] sm:$0xff]
        %v494 = vld [vmem:[%s4] sm:$0x1]
        %v496 = vlaneseq
        %v497 = vshrl.u32 %v496, 7
        %v498 = vsub.s32 0, %v497
        %v499 = vrot.slane %v494, %v498
        %501 = vmatprep.subr.mxu0 0.0
        %502 = vmatpush1.msra.mxu0 %v490
        %503 = vmatprep.subr.mxu0 0.0
        %504 = vmatpush1.msra.mxu0 %v491
        %505 = vmatprep.subr.mxu0 0.0
        %506 = vmatpush1.msra.mxu0 %v492
        %507 = vmatprep.subr.mxu0 0.0
        %508 = vmatpush1.msra.mxu0 %v493
        %509 = vmatprep.subr.mxu0 0.0
        %510 = vmatpush1.msra.mxu0 0.0
        %511 = vmatprep.subr.mxu0 0.0
        %512 = vmatpush1.msra.mxu0 0.0
        %513 = vmatprep.subr.mxu0 0.0
        %514 = vmatpush1.msra.mxu0 0.0
        %515 = vmatprep.subr.mxu0 0.0
        %516 = vmatpush1.msra.mxu0 0.0
        %517 = vmatprep.subr.mxu0 0.0
        %518 = vmatpush1.msra.mxu0 0.0
        %519 = vmatprep.subr.mxu0 0.0
        %520 = vmatpush1.msra.mxu0 0.0
        %521 = vmatprep.subr.mxu0 0.0
        %522 = vmatpush1.msra.mxu0 0.0
        %523 = vmatprep.subr.mxu0 0.0
        %524 = vmatpush1.msra.mxu0 0.0
        %525 = vmatprep.subr.mxu0 0.0
        %526 = vmatpush1.msra.mxu0 0.0
        %527 = vmatprep.subr.mxu0 0.0
        %528 = vmatpush1.msra.mxu0 0.0
        %529 = vmatprep.subr.mxu0 0.0
        %530 = vmatpush1.msra.mxu0 0.0
        %531 = vmatprep.subr.mxu0 0.0
        %532 = vmatpush1.msra.mxu0 0.0
        %533 = vmatprep.subr.mxu0 0.0
        %534 = vmatpush1.msra.mxu0 0.0
        %535 = vmatprep.subr.mxu0 0.0
        %536 = vmatpush1.msra.mxu0 0.0
        %537 = vmatprep.subr.mxu0 0.0
        %538 = vmatpush1.msra.mxu0 0.0
        %539 = vmatprep.subr.mxu0 0.0
        %540 = vmatpush1.msra.mxu0 0.0
        %541 = vmatprep.subr.mxu0 0.0
        %542 = vmatpush1.msra.mxu0 0.0
        %543 = vmatprep.subr.mxu0 0.0
        %544 = vmatpush1.msra.mxu0 0.0
        %545 = vmatprep.subr.mxu0 0.0
        %546 = vmatpush1.msra.mxu0 0.0
        %547 = vmatprep.subr.mxu0 0.0
        %548 = vmatpush1.msra.mxu0 0.0
        %549 = vmatprep.subr.mxu0 0.0
        %550 = vmatpush1.msra.mxu0 0.0
        %551 = vmatprep.subr.mxu0 0.0
        %552 = vmatpush1.msra.mxu0 0.0
        %553 = vmatprep.subr.mxu0 0.0
        %554 = vmatpush1.msra.mxu0 0.0
        %555 = vmatprep.subr.mxu0 0.0
        %556 = vmatpush1.msra.mxu0 0.0
        %557 = vmatprep.subr.mxu0 0.0
        %558 = vmatpush1.msra.mxu0 0.0
        %559 = vmatprep.subr.mxu0 0.0
        %560 = vmatpush1.msra.mxu0 0.0
        %561 = vmatprep.subr.mxu0 0.0
        %562 = vmatpush1.msra.mxu0 0.0
        %563 = vmatprep.subr.mxu0 0.0
        %564 = vmatpush1.msra.mxu0 0.0
        %565 = vmatprep.mubr.f32.mxu0 0.0
        %566 = vmatmul.mubr.f32.gmra.mrb[0].mxu0 %v410
        %v567 = vpop.f32.mrb[0].mxu0
        %v568 = vadd.f32 %v499, %v567
        %v569 = vpop.f32.mrb[0].mxu0
        %570 = vmatprep.mubr.f32.mxu0 0.0
        %571 = vmatmul.mubr.f32.gmra.mrb[0].mxu0 %v413
        %v572 = vpop.f32.mrb[0].mxu0
        %v573 = vadd.f32 %v499, %v572
        %v574 = vpop.f32.mrb[0].mxu0
        %575 = vdwg.mxu0
        %v576 = vxor.u32 %v568, 2147483648
        %v577 = vxor.u32 %v573, 2147483648
        %v578 = vmul.f32 %v576, 1.442695
        %v579 = vpow.pop %v578
        %v580 = vmul.f32 %v577, 1.442695
        %v581 = vpow.pop %v580
        %v582 = vadd.f32 %v579, 1.0
        %v583 = vadd.f32 %v581, 1.0
        %v584 = vrcp.pop %v582
        %v585 = vmul.f32 1.0, %v584
        %v586 = vrcp.pop %v583
        %v587 = vmul.f32 1.0, %v586
        %v588 = vmul.f32 %v482, %v585
        %v589 = vmul.f32 %v487, %v587
        %590 = vst.msk [vmem:[#allocation2 + $0x10] sm:$0xff] %vm408, 0.0
        %591 = vst.msk [vmem:[#allocation2] sm:$0xff] %vm408, %v588
        %592 = vst.msk [vmem:[#allocation2 + $0x8] sm:$0xff] %vm408, %v589
        %v593 = vld [vmem:[#allocation2] sm:$0xff]
        %v594 = vld [vmem:[#allocation2 + $0x8] sm:$0xff]
        %v595 = vld [vmem:[#allocation2 + $0x10] sm:$0xff]
        %v596 = vld [vmem:[%s5] sm:$0xff]
        %v597 = vld [vmem:[%s5 + $0x8] sm:$0x7f]
        %v598 = vld [vmem:[%s6] sm:$0x1]
        %v600 = vlaneseq
        %v601 = vshrl.u32 %v600, 7
        %v602 = vsub.s32 0, %v601
        %v603 = vrot.slane %v598, %v602
        %v605 = vrot.slane %v593, 1
        %v606 = vrot.slane %v594, 1
        %v607 = vrot.slane %v595, 1
        %v608 = vlaneseq
        %v609 = vshrl.u32 %v608, 7
        %vm610 = vcmp.lt.s32.totalorder %v609, 7
        %v611 = vsel %vm610, %v605, %v606
        %v612 = vsel %vm610, %v607, %v605
        %v613 = vlaneseq
        %v614 = vshrl.u32 %v613, 7
        %v615 = vsub.s32 0, %v614
        %v616 = vrot.slane %v596, %v615
        %v617 = vmul.f32 %v612, %v616
        %v618 = vmul.f32 %v611, %v616
        %v619 = vadd.f32 %v603, %v617
        %v620 = vadd.f32 %v603, %v618
        %v621 = vrot.slane %v593, 2
        %v622 = vrot.slane %v594, 2
        %v623 = vrot.slane %v595, 2
        %vm624 = vcmp.lt.s32.totalorder %v609, 6
        %v625 = vsel %vm624, %v621, %v622
        %v626 = vsel %vm624, %v623, %v621
        %v627 = vlaneseq
        %v628 = vshrl.u32 %v627, 7
        %v629 = vsub.s32 1, %v628
        %v630 = vrot.slane %v596, %v629
        %v631 = vmul.f32 %v626, %v630
        %v632 = vmul.f32 %v625, %v630
        %v633 = vadd.f32 %v619, %v631
        %v634 = vadd.f32 %v620, %v632
        %v635 = vrot.slane %v593, 3
        %v636 = vrot.slane %v594, 3
        %v637 = vrot.slane %v595, 3
        %vm638 = vcmp.lt.s32.totalorder %v609, 5
        %v639 = vsel %vm638, %v635, %v636
        %v640 = vsel %vm638, %v637, %v635
        %v641 = vlaneseq
        %v642 = vshrl.u32 %v641, 7
        %v643 = vsub.s32 2, %v642
        %v644 = vrot.slane %v596, %v643
        %v645 = vmul.f32 %v640, %v644
        %v646 = vmul.f32 %v639, %v644
        %v647 = vadd.f32 %v633, %v645
        %v648 = vadd.f32 %v634, %v646
        %v649 = vrot.slane %v593, 4
        %v650 = vrot.slane %v594, 4
        %v651 = vrot.slane %v595, 4
        %vm652 = vcmp.lt.s32.totalorder %v609, 4
        %v653 = vsel %vm652, %v649, %v650
        %v654 = vsel %vm652, %v651, %v649
        %v655 = vlaneseq
        %v656 = vshrl.u32 %v655, 7
        %v657 = vsub.s32 3, %v656
        %v658 = vrot.slane %v596, %v657
        %v659 = vmul.f32 %v654, %v658
        %v660 = vmul.f32 %v653, %v658
        %v661 = vadd.f32 %v647, %v659
        %v662 = vadd.f32 %v648, %v660
        %v663 = vrot.slane %v593, 5
        %v664 = vrot.slane %v594, 5
        %v665 = vrot.slane %v595, 5
        %vm666 = vcmp.lt.s32.totalorder %v609, 3
        %v667 = vsel %vm666, %v663, %v664
        %v668 = vsel %vm666, %v665, %v663
        %v669 = vlaneseq
        %v670 = vshrl.u32 %v669, 7
        %v671 = vsub.s32 4, %v670
        %v672 = vrot.slane %v596, %v671
        %v673 = vmul.f32 %v668, %v672
        %v674 = vmul.f32 %v667, %v672
        %v675 = vadd.f32 %v661, %v673
        %v676 = vadd.f32 %v662, %v674
        %v677 = vrot.slane %v593, 6
        %v678 = vrot.slane %v594, 6
        %v679 = vrot.slane %v595, 6
        %vm680 = vcmp.lt.s32.totalorder %v609, 2
        %v681 = vsel %vm680, %v677, %v678
        %v682 = vsel %vm680, %v679, %v677
        %v683 = vlaneseq
        %v684 = vshrl.u32 %v683, 7
        %v685 = vsub.s32 5, %v684
        %v686 = vrot.slane %v596, %v685
        %v687 = vmul.f32 %v682, %v686
        %v688 = vmul.f32 %v681, %v686
        %v689 = vadd.f32 %v675, %v687
        %v690 = vadd.f32 %v676, %v688
        %v691 = vrot.slane %v593, 7
        %v692 = vrot.slane %v594, 7
        %v693 = vrot.slane %v595, 7
        %vm694 = vcmp.lt.s32.totalorder %v609, 1
        %v695 = vsel %vm694, %v691, %v692
        %v696 = vsel %vm694, %v693, %v691
        %v697 = vlaneseq
        %v698 = vshrl.u32 %v697, 7
        %v699 = vsub.s32 6, %v698
        %v700 = vrot.slane %v596, %v699
        %v701 = vmul.f32 %v696, %v700
        %v702 = vmul.f32 %v695, %v700
        %v703 = vadd.f32 %v689, %v701
        %v704 = vadd.f32 %v690, %v702
        %v705 = vlaneseq
        %v706 = vshrl.u32 %v705, 7
        %v707 = vsub.s32 7, %v706
        %v708 = vrot.slane %v596, %v707
        %v709 = vmul.f32 %v593, %v708
        %v710 = vmul.f32 %v594, %v708
        %v711 = vadd.f32 %v703, %v709
        %v712 = vadd.f32 %v704, %v710
        %v713 = vsel %vm610, %v606, %v607
        %v714 = vlaneseq
        %v715 = vshrl.u32 %v714, 7
        %v716 = vsub.s32 0, %v715
        %v717 = vrot.slane %v597, %v716
        %v718 = vmul.f32 %v611, %v717
        %v719 = vmul.f32 %v713, %v717
        %v720 = vadd.f32 %v711, %v718
        %v721 = vadd.f32 %v712, %v719
        %v722 = vsel %vm624, %v622, %v623
        %v723 = vlaneseq
        %v724 = vshrl.u32 %v723, 7
        %v725 = vsub.s32 1, %v724
        %v726 = vrot.slane %v597, %v725
        %v727 = vmul.f32 %v625, %v726
        %v728 = vmul.f32 %v722, %v726
        %v729 = vadd.f32 %v720, %v727
        %v730 = vadd.f32 %v721, %v728
        %v731 = vsel %vm638, %v636, %v637
        %v732 = vlaneseq
        %v733 = vshrl.u32 %v732, 7
        %v734 = vsub.s32 2, %v733
        %v735 = vrot.slane %v597, %v734
        %v736 = vmul.f32 %v639, %v735
        %v737 = vmul.f32 %v731, %v735
        %v738 = vadd.f32 %v729, %v736
        %v739 = vadd.f32 %v730, %v737
        %v740 = vsel %vm652, %v650, %v651
        %v741 = vlaneseq
        %v742 = vshrl.u32 %v741, 7
        %v743 = vsub.s32 3, %v742
        %v744 = vrot.slane %v597, %v743
        %v745 = vmul.f32 %v653, %v744
        %v746 = vmul.f32 %v740, %v744
        %v747 = vadd.f32 %v738, %v745
        %v748 = vadd.f32 %v739, %v746
        %v749 = vsel %vm666, %v664, %v665
        %v750 = vlaneseq
        %v751 = vshrl.u32 %v750, 7
        %v752 = vsub.s32 4, %v751
        %v753 = vrot.slane %v597, %v752
        %v754 = vmul.f32 %v667, %v753
        %v755 = vmul.f32 %v749, %v753
        %v756 = vadd.f32 %v747, %v754
        %v757 = vadd.f32 %v748, %v755
        %v758 = vsel %vm680, %v678, %v679
        %v759 = vlaneseq
        %v760 = vshrl.u32 %v759, 7
        %v761 = vsub.s32 5, %v760
        %v762 = vrot.slane %v597, %v761
        %v763 = vmul.f32 %v681, %v762
        %v764 = vmul.f32 %v758, %v762
        %v765 = vadd.f32 %v756, %v763
        %v766 = vadd.f32 %v757, %v764
        %v767 = vsel %vm694, %v692, %v693
        %v768 = vlaneseq
        %v769 = vshrl.u32 %v768, 7
        %v770 = vsub.s32 6, %v769
        %v771 = vrot.slane %v597, %v770
        %v772 = vmul.f32 %v695, %v771
        %v773 = vmul.f32 %v767, %v771
        %v774 = vadd.f32 %v765, %v772
        %v775 = vadd.f32 %v766, %v773
        %v776 = vxor.u32 %v774, 2147483648
        %v777 = vxor.u32 %v775, 2147483648
        %v778 = vmul.f32 %v776, 1.442695
        %v779 = vpow.pop %v778
        %v780 = vmul.f32 %v777, 1.442695
        %v781 = vpow.pop %v780
        %v782 = vadd.f32 %v779, 1.0
        %v783 = vadd.f32 %v781, 1.0
        %v784 = vrcp.pop %v782
        %v785 = vmul.f32 1.0, %v784
        %v786 = vrcp.pop %v783
        %v787 = vmul.f32 1.0, %v786
        %v788 = vmul.f32 %v774, %v785
        %v789 = vmul.f32 %v775, %v787
        %v790 = vld [vmem:[#allocation9] sm:$0xff]
        %v791 = vld [vmem:[#allocation9 + $0x8] sm:$0xff]
        %v792 = vld [vmem:[#allocation9 + $0x10] sm:$0xff]
        %v793 = vld [vmem:[#allocation9 + $0x18] sm:$0xff]
        %v794 = vld [vmem:[%s8] sm:$0x1]
        %v796 = vlaneseq
        %v797 = vshrl.u32 %v796, 7
        %v798 = vsub.s32 0, %v797
        %v799 = vrot.slane %v794, %v798
        %v802 = vsel %vm408, %v788, 0
        %v805 = vsel %vm408, %v789, 0
        %807 = vmatprep.subr.mxu0 0.0
        %808 = vmatpush1.msra.mxu0 %v790
        %809 = vmatprep.subr.mxu0 0.0
        %810 = vmatpush1.msra.mxu0 %v791
        %811 = vmatprep.subr.mxu0 0.0
        %812 = vmatpush1.msra.mxu0 %v792
        %813 = vmatprep.subr.mxu0 0.0
        %814 = vmatpush1.msra.mxu0 %v793
        %815 = vmatprep.subr.mxu0 0.0
        %816 = vmatpush1.msra.mxu0 0.0
        %817 = vmatprep.subr.mxu0 0.0
        %818 = vmatpush1.msra.mxu0 0.0
        %819 = vmatprep.subr.mxu0 0.0
        %820 = vmatpush1.msra.mxu0 0.0
        %821 = vmatprep.subr.mxu0 0.0
        %822 = vmatpush1.msra.mxu0 0.0
        %823 = vmatprep.subr.mxu0 0.0
        %824 = vmatpush1.msra.mxu0 0.0
        %825 = vmatprep.subr.mxu0 0.0
        %826 = vmatpush1.msra.mxu0 0.0
        %827 = vmatprep.subr.mxu0 0.0
        %828 = vmatpush1.msra.mxu0 0.0
        %829 = vmatprep.subr.mxu0 0.0
        %830 = vmatpush1.msra.mxu0 0.0
        %831 = vmatprep.subr.mxu0 0.0
        %832 = vmatpush1.msra.mxu0 0.0
        %833 = vmatprep.subr.mxu0 0.0
        %834 = vmatpush1.msra.mxu0 0.0
        %835 = vmatprep.subr.mxu0 0.0
        %836 = vmatpush1.msra.mxu0 0.0
        %837 = vmatprep.subr.mxu0 0.0
        %838 = vmatpush1.msra.mxu0 0.0
        %839 = vmatprep.subr.mxu0 0.0
        %840 = vmatpush1.msra.mxu0 0.0
        %841 = vmatprep.subr.mxu0 0.0
        %842 = vmatpush1.msra.mxu0 0.0
        %843 = vmatprep.subr.mxu0 0.0
        %844 = vmatpush1.msra.mxu0 0.0
        %845 = vmatprep.subr.mxu0 0.0
        %846 = vmatpush1.msra.mxu0 0.0
        %847 = vmatprep.subr.mxu0 0.0
        %848 = vmatpush1.msra.mxu0 0.0
        %849 = vmatprep.subr.mxu0 0.0
        %850 = vmatpush1.msra.mxu0 0.0
        %851 = vmatprep.subr.mxu0 0.0
        %852 = vmatpush1.msra.mxu0 0.0
        %853 = vmatprep.subr.mxu0 0.0
        %854 = vmatpush1.msra.mxu0 0.0
        %855 = vmatprep.subr.mxu0 0.0
        %856 = vmatpush1.msra.mxu0 0.0
        %857 = vmatprep.subr.mxu0 0.0
        %858 = vmatpush1.msra.mxu0 0.0
        %859 = vmatprep.subr.mxu0 0.0
        %860 = vmatpush1.msra.mxu0 0.0
        %861 = vmatprep.subr.mxu0 0.0
        %862 = vmatpush1.msra.mxu0 0.0
        %863 = vmatprep.subr.mxu0 0.0
        %864 = vmatpush1.msra.mxu0 0.0
        %865 = vmatprep.subr.mxu0 0.0
        %866 = vmatpush1.msra.mxu0 0.0
        %867 = vmatprep.subr.mxu0 0.0
        %868 = vmatpush1.msra.mxu0 0.0
        %869 = vmatprep.subr.mxu0 0.0
        %870 = vmatpush1.msra.mxu0 0.0
        %871 = vmatprep.mubr.f32.mxu0 0.0
        %872 = vmatmul.mubr.f32.gmra.mrb[0].mxu0 %v802
        %v873 = vpop.f32.mrb[0].mxu0
        %v874 = vadd.f32 %v799, %v873
        %v875 = vpop.f32.mrb[0].mxu0
        %876 = vmatprep.mubr.f32.mxu0 0.0
        %877 = vmatmul.mubr.f32.gmra.mrb[0].mxu0 %v805
        %v878 = vpop.f32.mrb[0].mxu0
        %v879 = vadd.f32 %v799, %v878
        %v880 = vpop.f32.mrb[0].mxu0
        %881 = vdwg.mxu0
        %882 = vst.msk [vmem:[%s394] sm:$0xff] %vm408, %v874
        %883 = vst.msk [vmem:[%s394 + $0x8] sm:$0xff] %vm408, %v879
        %s884 = sand.u32 %s230, 1
        %s885 = scalar_lea.sflag [#allocation5], %s884
        %s886 = sand.u32 %s230, 1
        %s887 = smul.addr %s886, 16
        %s888 = scalar_lea.vmem [#allocation11], %s887
        // Predicated region
        $region73: #{tpu_custom_call.1} parent=55 // pred_check
          %p889 = pneg %p240
        $region74: #{tpu_custom_call.1} parent=55 // pred_check_branch
          %891 = sbr.rel (%p889) target = $region76
        $region75: #{tpu_custom_call.1} parent=55 // pred_region
          %s893 = ssub.s32 256, 256
          %894 = vsyncadd %s885, %s893
          %s895 = smul.addr %s28, 2
          %s896 = smul.addr %s895, 128
          %s897 = scalar_lea.hbm %s9, %s896
          %s898 = sshll.u32 %s888, 4
          %s899 = int_to_ptr.vmem [resolvable:$true] %s898
          %904 = dma.vmem_to_hbm [thread:$0]  %s899, 256, %s897, %s885, 128, 128, 8
        $region76: #{tpu_custom_call.1} parent=55 // pred_fallthru
          _
      $region56: #{tpu_custom_call.1} parent=5 // pred_fallthru
        _
      %p905 = scmp.le.s32.totalorder 2, %s23
      // Predicated region
      $region77: #{tpu_custom_call.1} parent=5 // pred_check
        %p906 = pneg %p905
      $region78: #{tpu_custom_call.1} parent=5 // pred_check_branch
        %908 = sbr.rel (%p906) target = $region80
      $region79: #{tpu_custom_call.1} parent=5 // pred_region
        %s909 = ssub.s32 %s23, 2
        // Predicated region
        $region81: #{tpu_custom_call.1} parent=79 // pred_check
          %p910 = pneg %p246
        $region82: #{tpu_custom_call.1} parent=79 // pred_check_branch
          %912 = sbr.rel (%p910) target = $region84
        $region83: #{tpu_custom_call.1} parent=79 // pred_region
          %s913 = sand.u32 %s231, 1
          %s914 = scalar_lea.sflag [#allocation5], %s913
          %s915 = sand.u32 %s231, 1
          %s916 = smul.addr %s915, 16
          %s917 = scalar_lea.vmem [#allocation11], %s916
          %918 = dma.done %s914, 256
        $region84: #{tpu_custom_call.1} parent=79 // pred_fallthru
          _
      $region80: #{tpu_custom_call.1} parent=5 // pred_fallthru
        _
    $region6: #{tpu_custom_call.1} parent=1 // loop_footer
      %s27 = sadd.s32 1, %s23
    $region7: #{tpu_custom_call.1} parent=1 // loop_footer_branch
      %22 = sbr.rel target = $region3
    $region8: #{tpu_custom_call.1} parent=1 // loop_exit
      _
    %919 = vsyncpa [#allocation4], 1
    %s920 = scalar_lea.sflag [#allocation4], 1
    %921 = vsyncpa %s920, 1
    %922 = vsyncpa [#allocation7], 1
    %923 = vsyncpa [#allocation10], 1
    %924 = vsyncpa [#allocation5], 1
    %s925 = scalar_lea.sflag [#allocation5], 1
    %926 = vsyncpa %s925, 1

</llo_original>
